<compile_context>
chip_gen: v5e
topology: v5e:2x2
jax: 0.10.0
libtpu: 0.0.40
codegen_flags: <defaults>
</compile_context>

<pallas_src>
import jax
import jax.numpy as jnp
from jax.experimental import pallas as pl
from jax.experimental.pallas import tpu as pltpu


_MAX_OUTSTANDING_DMAS = 4        # 2-4 in-flight DMAs are enough to stream HBM
_MIN_BYTES_PER_CHUNK = 4 << 20   # don't bother splitting below ~4 MiB per DMA


def _chunk_boundaries(lead: int, total_bytes: int):
    """Static (offset, size) chunks along the leading axis, or None (1 DMA)."""
    if lead < 2 or total_bytes < 2 * _MIN_BYTES_PER_CHUNK:
        return None
    n = min(_MAX_OUTSTANDING_DMAS, lead,
            max(2, total_bytes // _MIN_BYTES_PER_CHUNK))
    if n < 2:
        return None
    base, rem = divmod(lead, n)
    bounds, lo = [], 0
    for c in range(n):
        sz = base + (1 if c < rem else 0)
        bounds.append((lo, sz))
        lo += sz
    return bounds


def _make_hbm_copy_kernel(boundaries):
    """HBM->HBM copy kernel: issue every chunk DMA, then drain them all."""

    def kernel(x_hbm, o_hbm, sems):
        if boundaries is None:
            cp = pltpu.make_async_copy(x_hbm, o_hbm, sems.at[0])
            cp.start()
            cp.wait()
        else:
            copies = []
            for c, (lo, sz) in enumerate(boundaries):  # static Python loop
                cp = pltpu.make_async_copy(
                    x_hbm.at[pl.ds(lo, sz)],
                    o_hbm.at[pl.ds(lo, sz)],
                    sems.at[c],
                )
                cp.start()
                copies.append(cp)
            for cp in copies:  # all DMAs in flight; now wait on each
                cp.wait()

    return kernel


def identity(x: jax.Array, *, materialize_copy: bool = False) -> jax.Array:
    """Forward pass of nn.Identity: y = x.

    materialize_copy=False (default): true identity — returns x unchanged,
    zero HBM traffic (the correct lowering of this module).
    materialize_copy=True: returns a bit-exact copy in a fresh HBM buffer via
    a Pallas HBM->HBM DMA kernel (for callers that need a distinct buffer or
    for benchmarking the copy path).
    """
    if not materialize_copy or x.size == 0:
        return x

    total_bytes = int(x.size) * jnp.dtype(x.dtype).itemsize
    lead = int(x.shape[0]) if x.ndim >= 1 else 1
    boundaries = _chunk_boundaries(lead, total_bytes)
    n_sems = 1 if boundaries is None else len(boundaries)

    return pl.pallas_call(
        _make_hbm_copy_kernel(boundaries),
        out_shape=jax.ShapeDtypeStruct(x.shape, x.dtype),
        in_specs=[pl.BlockSpec(memory_space=pl.ANY)],
        out_specs=pl.BlockSpec(memory_space=pl.ANY),
        scratch_shapes=[pltpu.SemaphoreType.DMA((n_sems,))],
        cost_estimate=pl.CostEstimate(
            flops=0, transcendentals=0, bytes_accessed=2 * total_bytes),
    )(x)


if __name__ == "__main__":
    key = jax.random.PRNGKey(0)

    # Small NCHW input consistent with SimCLR feature maps.
    x = jax.random.normal(key, (2, 4, 16, 16), dtype=jnp.float32)

    # Default path: true identity (no kernel, no HBM traffic).
    y0 = identity(x)
    assert y0.shape == x.shape and y0.dtype == x.dtype
    assert bool(jnp.all(y0 == x))

    # Pallas HBM->HBM DMA copy path (distinct output buffer).
    y = identity(x, materialize_copy=True)
    jax.block_until_ready(y)
    assert y.shape == x.shape and y.dtype == x.dtype
    assert bool(jnp.all(y == x))

    # Ragged (non-128-divisible) size: DMA path handles it without any
    # full-array VMEM block.
    x2 = jax.random.normal(jax.random.PRNGKey(1), (3, 5, 7), dtype=jnp.float32)
    y2 = identity(x2, materialize_copy=True)
    jax.block_until_ready(y2)
    assert y2.shape == x2.shape and y2.dtype == x2.dtype
    assert bool(jnp.all(y2 == x2))

    print("KERNEL_OK")
</pallas_src>

<mosaic_0001>
module attributes {stable_mosaic.version = 11 : i64} {
  func.func @kernel(%arg0: memref<2x4x16x16xf32, #tpu.memory_space<any>>, %arg1: memref<2x4x16x16xf32, #tpu.memory_space<any>>, %arg2: memref<1x!tpu.dma_semaphore, #tpu.memory_space<semaphore_mem>>) attributes {dimension_semantics = [], scalar_prefetch = 0 : i64, scratch_operands = 1 : i64, tpu.core_type = #tpu.core_type<tc>} {
    %c0_i32 = arith.constant 0 : i32
    %0 = tpu.memref_slice %arg2[%c0_i32] : memref<1x!tpu.dma_semaphore, #tpu.memory_space<semaphore_mem>> -> memref<1x!tpu.dma_semaphore, #tpu.memory_space<semaphore_mem>>
    %1 = tpu.memref_squeeze %0 : memref<1x!tpu.dma_semaphore, #tpu.memory_space<semaphore_mem>> -> memref<!tpu.dma_semaphore, #tpu.memory_space<semaphore_mem>>
    tpu.enqueue_dma source(%arg0 : memref<2x4x16x16xf32, #tpu.memory_space<any>>) target(%arg1 : memref<2x4x16x16xf32, #tpu.memory_space<any>>) target_semaphore(%1 : memref<!tpu.dma_semaphore, #tpu.memory_space<semaphore_mem>>)
    %c0_i32_0 = arith.constant 0 : i32
    %2 = tpu.memref_slice %arg2[%c0_i32_0] : memref<1x!tpu.dma_semaphore, #tpu.memory_space<semaphore_mem>> -> memref<1x!tpu.dma_semaphore, #tpu.memory_space<semaphore_mem>>
    %3 = tpu.memref_squeeze %2 : memref<1x!tpu.dma_semaphore, #tpu.memory_space<semaphore_mem>> -> memref<!tpu.dma_semaphore, #tpu.memory_space<semaphore_mem>>
    tpu.wait_dma2 semaphore(%3 : memref<!tpu.dma_semaphore, #tpu.memory_space<semaphore_mem>>) src(%arg0 : memref<2x4x16x16xf32, #tpu.memory_space<any>>) dst(%arg1 : memref<2x4x16x16xf32, #tpu.memory_space<any>>)
    return
  }
}

</mosaic_0001>

<llo_original>
// kernel: tpu_custom_call.1
$region0: #{tpu_custom_call.1}
  #allocation0 [shape = 'u32[]', space=smem, size = 0x4, offset = 0x4, fixed_abs, tag = 'smem constant byte address 0x4 - core index']
  #allocation1 [shape = 'u32[72,128]{1,0:T(1,128)}', space=vmem, size = 0x9000, scoped, tag = 'internal scratch']
  #allocation2 [shape = 's32[1]{0}', space=sflag, size = 0x4, scoped, tag = 'scratch operand']
  #allocation3 [shape = 's32[]', space=sflag, size = 0x4, offset = 0, fixed_abs, tag = 'sflag constant byte address 0x0 - dummy sync flag']
  #allocation4 [shape = 'u32[0]{0}', space=smem, size = 0, offset = 0, fixed_abs, tag = 'smem constant byte address 0x0 - null']
  %s0 = inlined_call_operand.hbm [shape: f32[2,4,16,16], index: 0, kind: input, shape index: {}]
  %s1 = inlined_call_operand.hbm [shape: f32[2,4,16,16], index: 1, kind: output, shape index: {}]
  %s2 = sld [smem:[#allocation0]]
  $region2: #{tpu_custom_call.1} parent=0
    _
  %s4 = ssub.s32 1, %s2
  %s5 = scalar_select 0, %s4, %s2
  %s7 = sshll.u32 1, 14
  %s8 = sxor.u32 4294967295, %s7
  %s10 = sshll.u32 %s0, 4
  %s11 = int_to_ptr.hbm [resolvable:$true] %s10
  %s12 = sshll.u32 %s1, 4
  %s13 = int_to_ptr.hbm [resolvable:$true] %s12
  %16 = dma.general %s11, 2048, %s13, [#allocation2], [#allocation3], [#allocation4], 0, 0
  %s17 = smul.u32 2, 4
  %s18 = smul.u32 %s17, 16
  %s19 = smul.u32 %s18, 1
  %s20 = sshll.u32 %s19, 4
  %21 = dma.done [#allocation2], %s20
  %22 = vsyncmov [#allocation2]
  %s23 = vpop.sfrf %22
  %p24 = scmp.eq.s32.totalorder %s23, 0
  %p25 = pneg %p24
  %27 = shalt.err (%p25)

</llo_original>
